<compile_context>
chip_gen: v7x
topology: tpu7x:2x2x1
jax: 0.10.0
libtpu: 0.0.40
codegen_flags: <defaults>
</compile_context>

<pallas_src>
import functools

import jax
import jax.numpy as jnp
from jax.experimental import pallas as pl
from jax.experimental.pallas import tpu as pltpu

EPS = 1e-5
NEG_SLOPE = 0.01  # torch.nn.LeakyReLU / AttentiveFP negative_slope default

_WHOLE_PARAMS = pltpu.CompilerParams(dimension_semantics=("arbitrary",))
_HEAD_PARAMS = pltpu.CompilerParams(dimension_semantics=("parallel", "parallel"),
                                    vmem_limit_bytes=32 * 1024 * 1024)

_GRU_W = ("wir", "wiz", "win", "whr", "whz", "whn")
_GRU_B = ("bir", "biz", "bin", "bhr", "bhz", "bhn")


# --------------------------- small helpers -----------------------------------

def _leaky(y):
    return jnp.where(y > 0, y, NEG_SLOPE * y)


def _apply_act(y, act):
    if act == "none":
        return y
    if act == "leaky_relu":
        return _leaky(y)
    if act == "relu":
        return jnp.maximum(y, 0.0)
    raise ValueError(act)


def _round_up(n, m):
    return ((n + m - 1) // m) * m


def _choose_tile(n):
    # rows per grid step: multiple of 8 (sublane), capped at 512 for VMEM / pipelining
    return min(_round_up(max(n, 8), 8), 512)


# --------------------------- Pallas kernels ---------------------------------
# All head kernels see 2-D refs: the head axis is squeezed away by the BlockSpec.

def _dense_kernel(x_ref, w_ref, b_ref, o_ref, *, act):
    y = jnp.dot(x_ref[...], w_ref[...], preferred_element_type=jnp.float32) + b_ref[...]
    o_ref[...] = _apply_act(y, act)


def _linear_bn_act_kernel(x_ref, w_ref, b_ref, g_ref, bt_ref, o_ref, *, act):
    # Linear -> BatchNorm1d (training-mode batch stats, biased variance) -> activation.
    # Whole-array block only: the axis-0 reduction needs the full batch.
    y = jnp.dot(x_ref[...], w_ref[...], preferred_element_type=jnp.float32) + b_ref[...]
    mu = jnp.mean(y, axis=0, keepdims=True)
    var = jnp.mean((y - mu) * (y - mu), axis=0, keepdims=True)
    y = (y - mu) * jax.lax.rsqrt(var + EPS) * g_ref[...] + bt_ref[...]
    o_ref[...] = _apply_act(y, act)


def _gate_node_kernel(h_ref, wh_ref, attr_ref, wh_out_ref, ai_out_ref):
    # wh = h @ W_h ; a_i = <h, att_r>  (fout=1 matmul replaced by VPU/XLU row-reduce)
    h = h_ref[...]
    wh_out_ref[...] = jnp.dot(h, wh_ref[...], preferred_element_type=jnp.float32)
    ai_out_ref[...] = jnp.sum(h * attr_ref[...], axis=-1, keepdims=True)


def _gate_edge_kernel(hw_ref, e_ref, ai_ref, we_ref, attl_ref, w2_ref, m_ref, s_ref):
    # z = leaky(wh[src] + e @ W_e); a_j = <z, att_l>; score = leaky(a_j + a_i[dst]); m = z @ W2
    z = hw_ref[...] + jnp.dot(e_ref[...], we_ref[...], preferred_element_type=jnp.float32)
    z = _leaky(z)
    a_j = jnp.sum(z * attl_ref[...], axis=-1, keepdims=True)
    s_ref[...] = _leaky(a_j + ai_ref[...])
    m_ref[...] = jnp.dot(z, w2_ref[...], preferred_element_type=jnp.float32)


def _gat_node_kernel(h_ref, w_ref, atts_ref, attd_ref, xp_ref, as_ref, ad_ref):
    xp = jnp.dot(h_ref[...], w_ref[...], preferred_element_type=jnp.float32)
    xp_ref[...] = xp
    as_ref[...] = jnp.sum(xp * atts_ref[...], axis=-1, keepdims=True)
    ad_ref[...] = jnp.sum(xp * attd_ref[...], axis=-1, keepdims=True)


def _mol_node_kernel(h_ref, w_ref, att_ref, xs_ref, as_ref):
    xs = jnp.dot(h_ref[...], w_ref[...], preferred_element_type=jnp.float32)
    xs_ref[...] = xs
    as_ref[...] = jnp.sum(xs * att_ref[...], axis=-1, keepdims=True)


def _gru_fused_kernel(x_ref, h_ref, wir, wiz, win, whr, whz, whn,
                      bir, biz, bin_, bhr, bhz, bhn, o_ref):
    # relu(GRUCell(elu(x), h)) -- elu/relu fused; gates as 3 separate matmuls (no lane slicing)
    x = jax.nn.elu(x_ref[...])
    h = h_ref[...]

    def mm(a, w):
        return jnp.dot(a, w[...], preferred_element_type=jnp.float32)

    r = jax.nn.sigmoid(mm(x, wir) + bir[...] + mm(h, whr) + bhr[...])
    z = jax.nn.sigmoid(mm(x, wiz) + biz[...] + mm(h, whz) + bhz[...])
    n = jnp.tanh(mm(x, win) + bin_[...] + r * (mm(h, whn) + bhn[...]))
    o_ref[...] = jnp.maximum((1.0 - z) * n + z * h, 0.0)


# --------------------------- Pallas wrappers ---------------------------------

def _full_spec(shape):
    return pl.BlockSpec(shape, lambda i: (0,) * len(shape))


def _head_call(kernel, row_args, const_args, out_widths, n):
    """Run kernel over (num_heads, row_tiles) in a single pallas_call.

    row_args:   list of (array, has_head). has_head arrays are (Hd, n, F); shared ones (n, F).
    const_args: per-head constants stacked as (Hd, r, c); one head block stays VMEM-resident
                across that head's row tiles.
    out_widths: feature widths of the f32 outputs; each output is (Hd, n, w).
    """
    num_heads = const_args[0].shape[0]
    tile = _choose_tile(n)
    padded = _round_up(n, tile)

    ins, in_specs = [], []
    for a, has_head in row_args:
        if has_head:
            if a.shape[1] != padded:
                a = jnp.pad(a, ((0, 0), (0, padded - a.shape[1]), (0, 0)))
            ins.append(a)
            in_specs.append(pl.BlockSpec((None, tile, a.shape[2]),
                                         lambda h, i: (h, i, 0)))
        else:
            if a.shape[0] != padded:
                a = jnp.pad(a, ((0, padded - a.shape[0]), (0, 0)))
            ins.append(a)
            in_specs.append(pl.BlockSpec((tile, a.shape[1]), lambda h, i: (i, 0)))
    for c in const_args:
        ins.append(c)
        in_specs.append(pl.BlockSpec((None,) + c.shape[1:], lambda h, i: (h, 0, 0)))

    out_specs = tuple(pl.BlockSpec((None, tile, w), lambda h, i: (h, i, 0))
                      for w in out_widths)
    out_shapes = tuple(jax.ShapeDtypeStruct((num_heads, padded, w), jnp.float32)
                       for w in out_widths)
    multi = len(out_widths) > 1

    outs = pl.pallas_call(
        kernel,
        out_shape=out_shapes if multi else out_shapes[0],
        grid=(num_heads, padded // tile),
        in_specs=in_specs,
        out_specs=out_specs if multi else out_specs[0],
        compiler_params=_HEAD_PARAMS,
    )(*ins)

    if not multi:
        return outs[:, :n]
    return tuple(o[:, :n] for o in outs)


def pallas_linear_bn_act(x, p, act):
    # TODO(synk): whole-array block (BatchNorm needs full-batch stats); split into a
    # two-pass stats + normalize pipeline for very large N.
    n, fin = x.shape
    fout = p["w"].shape[1]
    return pl.pallas_call(
        functools.partial(_linear_bn_act_kernel, act=act),
        out_shape=jax.ShapeDtypeStruct((n, fout), jnp.float32),
        grid=(1,),
        in_specs=[_full_spec((n, fin)), _full_spec((fin, fout)),
                  _full_spec((1, fout)), _full_spec((1, fout)), _full_spec((1, fout))],
        out_specs=_full_spec((n, fout)),
        compiler_params=_WHOLE_PARAMS,
    )(x, p["w"], p["b"], p["gamma"], p["beta"])


def pallas_gru_heads(x, h, gp):
    # relu(GRU(elu(x), h)) for all heads at once; x,h: (Hd, n, H)
    return _head_call(_gru_fused_kernel, [(x, True), (h, True)],
                      [gp[k] for k in _GRU_W + _GRU_B], [h.shape[2]], h.shape[1])


# --------------------------- plain-JAX graph glue ----------------------------
# Segment ops for all heads in one scatter via per-head offset segment ids.

def _flat_seg_ids(seg, num_heads, num_segments):
    return (seg[None, :] + jnp.arange(num_heads, dtype=seg.dtype)[:, None] * num_segments)


def seg_softmax_heads(scores, seg, num_heads, num_segments):
    # scores: (Hd, L) -> per (head, segment) softmax weights (Hd, L)
    ids = _flat_seg_ids(seg, num_heads, num_segments).reshape(-1)
    flat = scores.reshape(-1)
    tot = num_heads * num_segments
    seg_max = jax.ops.segment_max(flat, ids, num_segments=tot)
    seg_max = jnp.where(jnp.isfinite(seg_max), seg_max, 0.0)
    e = jnp.exp(flat - seg_max[ids])
    denom = jax.ops.segment_sum(e, ids, num_segments=tot)
    return (e / (denom[ids] + 1e-16)).reshape(scores.shape)


def seg_sum_heads(vals, seg, num_heads, num_segments):
    # vals: (Hd, L, F) -> (Hd, num_segments, F)
    ids = _flat_seg_ids(seg, num_heads, num_segments).reshape(-1)
    flat = vals.reshape(-1, vals.shape[-1])
    out = jax.ops.segment_sum(flat, ids, num_segments=num_heads * num_segments)
    return out.reshape(num_heads, num_segments, vals.shape[-1])


# --------------------------- parameter init ----------------------------------

def _gru_heads_params(key, num_heads, hid, scale=0.1):
    ks = jax.random.split(key, 12)
    p = {}
    for i, nm in enumerate(_GRU_W):
        p[nm] = scale * jax.random.normal(ks[i], (num_heads, hid, hid), jnp.float32)
    for i, nm in enumerate(_GRU_B):
        p[nm] = scale * jax.random.normal(ks[6 + i], (num_heads, 1, hid), jnp.float32)
    return p


def _bn_dense(key, fin, fout, scale=0.1):
    k1, k2, k3, k4 = jax.random.split(key, 4)
    return {"w": scale * jax.random.normal(k1, (fin, fout), jnp.float32),
            "b": scale * jax.random.normal(k2, (1, fout), jnp.float32),
            "gamma": 1.0 + scale * jax.random.normal(k3, (1, fout), jnp.float32),
            "beta": scale * jax.random.normal(k4, (1, fout), jnp.float32)}


def init_afp_heads(key, num_heads, node_in, edge_in, hidden, out_dim,
                   layers_atom, layers_mol, scale=0.1):
    keys = iter(jax.random.split(key, 128))

    def nrm(shape):
        return scale * jax.random.normal(next(keys), shape, jnp.float32)

    hd = num_heads
    p = {"num_heads": hd, "hidden": hidden, "out_dim": out_dim, "num_timesteps": layers_mol,
         "lin1": {"w": nrm((hd, node_in, hidden)), "b": nrm((hd, 1, hidden))},
         "gate": {"w_h": nrm((hd, hidden, hidden)), "w_e": nrm((hd, edge_in, hidden)),
                  "att_l": nrm((hd, 1, hidden)), "att_r": nrm((hd, 1, hidden)),
                  "w2": nrm((hd, hidden, hidden)), "bias": nrm((hd, 1, hidden))},
         "gru0": _gru_heads_params(next(keys), hd, hidden, scale)}
    p["atom_layers"] = [
        {"w": nrm((hd, hidden, hidden)), "att_src": nrm((hd, 1, hidden)),
         "att_dst": nrm((hd, 1, hidden)), "bias": nrm((hd, 1, hidden)),
         "gru": _gru_heads_params(next(keys), hd, hidden, scale)}
        for _ in range(max(layers_atom - 1, 0))]
    p["mol_conv"] = {"w_src": nrm((hd, hidden, hidden)), "w_dst": nrm((hd, hidden, hidden)),
                     "att_src": nrm((hd, 1, hidden)), "att_dst": nrm((hd, 1, hidden)),
                     "bias": nrm((hd, 1, hidden))}
    p["mol_gru"] = _gru_heads_params(next(keys), hd, hidden, scale)
    p["lin2"] = {"w": nrm((hd, hidden, out_dim)), "b": nrm((hd, 1, out_dim))}
    return p


def init_origin_channel(key, net_params):
    k1, k2, k3, k4 = jax.random.split(key, 4)
    d = net_params["L1_hidden_dim"]
    assert d % 8 == 0 and net_params["hidden_dim"] % 8 == 0, \
        "hidden dims must be multiples of 8 (TPU sublane tiling)"
    return {
        "node_emb": _bn_dense(k1, net_params["num_atom_type"], d),
        "edge_emb": _bn_dense(k2, net_params["num_bond_type"], d),
        "heads": init_afp_heads(k3, net_params["num_heads"], d, d,
                                net_params["hidden_dim"], d,
                                net_params["L1_layers_atom"], net_params["L1_layers_mol"]),
        "attend": _bn_dense(k4, net_params["num_heads"] * d, d),
    }


# --------------------------- forward passes ----------------------------------

def afp_heads_forward(p, x, edge_index, edge_attr, batch, num_graphs):
    src, dst = edge_index[0], edge_index[1]
    n = x.shape[0]
    e = edge_attr.shape[0]
    hd = p["num_heads"]
    hidden = p["hidden"]

    # node embedding (all heads): h = leaky_relu(x @ W1 + b1)  -> (Hd, N, H)
    h = _head_call(functools.partial(_dense_kernel, act="leaky_relu"),
                   [(x, False)], [p["lin1"]["w"], p["lin1"]["b"]], [hidden], n)

    # ---- GATEConv (edge-featured attention) + GRU -------------------------------
    g = p["gate"]
    # N-sized fused projections: wh = h@W_h, a_i = <h, att_r>
    wh, a_i = _head_call(_gate_node_kernel, [(h, True)],
                         [g["w_h"], g["att_r"]], [hidden, 1], n)
    # E-sized fused edge kernel: z, attention score, pre-scaled message
    m, score = _head_call(_gate_edge_kernel,
                          [(wh[:, src], True), (edge_attr, False), (a_i[:, dst], True)],
                          [g["w_e"], g["att_l"], g["w2"]], [hidden, 1], e)
    alpha = seg_softmax_heads(score[..., 0], dst, hd, n)                       # (Hd, E)
    agg = seg_sum_heads(m * alpha[..., None], dst, hd, n) + g["bias"]          # (Hd, N, H)
    h = pallas_gru_heads(agg, h, p["gru0"])                                    # relu(GRU(elu(agg), h))

    # ---- atom-level GATConv + GRU layers -----------------------------------------
    for lp in p["atom_layers"]:
        xp, a_s, a_d = _head_call(_gat_node_kernel, [(h, True)],
                                  [lp["w"], lp["att_src"], lp["att_dst"]],
                                  [hidden, 1, 1], n)
        scores = _leaky(a_s[:, src, 0] + a_d[:, dst, 0])                       # (Hd, E)
        alpha = seg_softmax_heads(scores, dst, hd, n)
        agg = seg_sum_heads(xp[:, src] * alpha[..., None], dst, hd, n) + lp["bias"]
        h = pallas_gru_heads(agg, h, lp["gru"])

    # ---- molecule-level attention readout with shared GRU ------------------------
    mc = p["mol_conv"]
    # h is fixed during readout -> hoist source projection + source score out of the loop
    xs, a_s = _head_call(_mol_node_kernel, [(h, True)],
                         [mc["w_src"], mc["att_src"]], [hidden, 1], n)
    # fold lin_dst followed by att_dst into one (H,) vector per head
    w_dst_att = jnp.einsum("hij,hj->hi", mc["w_dst"], mc["att_dst"][:, 0, :])  # (Hd, H)
    g_vec = jnp.maximum(seg_sum_heads(h, batch, hd, num_graphs), 0.0)          # (Hd, B, H)
    for _ in range(p["num_timesteps"]):
        a_d = jnp.einsum("hbi,hi->hb", g_vec, w_dst_att)                       # (Hd, B) -- tiny
        scores = _leaky(a_s[..., 0] + a_d[:, batch])                           # (Hd, N)
        alpha = seg_softmax_heads(scores, batch, hd, num_graphs)
        msg = seg_sum_heads(xs * alpha[..., None], batch, hd, num_graphs) + mc["bias"]
        g_vec = pallas_gru_heads(msg, g_vec, p["mol_gru"])

    # per-head output projection -> (Hd, B, out_dim)
    return _head_call(functools.partial(_dense_kernel, act="none"),
                      [(g_vec, True)], [p["lin2"]["w"], p["lin2"]["b"]],
                      [p["out_dim"]], num_graphs)


def origin_channel_forward(params, x, edge_index, edge_attr, batch, num_graphs):
    embedded_x = pallas_linear_bn_act(x, params["node_emb"], act="leaky_relu")
    embedded_e = pallas_linear_bn_act(edge_attr, params["edge_emb"], act="leaky_relu")
    heads_out = afp_heads_forward(params["heads"], embedded_x, edge_index, embedded_e,
                                  batch, num_graphs)                           # (Hd, B, D)
    cat = jnp.transpose(heads_out, (1, 0, 2)).reshape(num_graphs, -1)          # [B, Hd*D]
    return pallas_linear_bn_act(cat, params["attend"], act="relu")             # [B, D]


# --------------------------- demo ---------------------------------------------

if __name__ == "__main__":
    net_params = {
        "num_atom_type": 16,
        "num_bond_type": 8,
        "L1_hidden_dim": 32,
        "hidden_dim": 32,
        "L1_layers_atom": 2,
        "L1_layers_mol": 2,
        "dropout": 0.0,
        "num_heads": 2,
    }
    key = jax.random.PRNGKey(0)
    kp, kx, ke = jax.random.split(key, 3)
    params = init_origin_channel(kp, net_params)

    nodes_per_graph, num_graphs = 12, 2
    n = nodes_per_graph * num_graphs
    # ring edges in both directions inside each graph -> every node has in-edges
    srcs, dsts = [], []
    for gidx in range(num_graphs):
        base = gidx * nodes_per_graph
        for i in range(nodes_per_graph):
            j = (i + 1) % nodes_per_graph
            srcs += [base + i, base + j]
            dsts += [base + j, base + i]
    edge_index = jnp.array([srcs, dsts], dtype=jnp.int32)                      # [2, E]
    e = edge_index.shape[1]
    batch = jnp.repeat(jnp.arange(num_graphs, dtype=jnp.int32), nodes_per_graph)

    x = jax.random.normal(kx, (n, net_params["num_atom_type"]), jnp.float32)
    edge_attr = jax.random.normal(ke, (e, net_params["num_bond_type"]), jnp.float32)

    out = origin_channel_forward(params, x, edge_index, edge_attr, batch, num_graphs)
    out = jax.block_until_ready(out)
    assert out.shape == (num_graphs, net_params["L1_hidden_dim"])
    assert bool(jnp.all(jnp.isfinite(out)))
    print("KERNEL_OK")
</pallas_src>

<mosaic_0001>
module attributes {stable_mosaic.version = 11 : i64} {
  func.func @_linear_bn_act_kernel(%arg0: i32, %arg1: memref<24x16xf32, #tpu.memory_space<vmem>>, %arg2: memref<16x32xf32, #tpu.memory_space<vmem>>, %arg3: memref<1x32xf32, #tpu.memory_space<vmem>>, %arg4: memref<1x32xf32, #tpu.memory_space<vmem>>, %arg5: memref<1x32xf32, #tpu.memory_space<vmem>>, %arg6: memref<24x32xf32, #tpu.memory_space<vmem>>) attributes {dimension_semantics = [#tpu.dimension_semantics<arbitrary>], iteration_bounds = array<i64: 1>, scalar_prefetch = 0 : i64, scratch_operands = 0 : i64, tpu.core_type = #tpu.core_type<tc>, window_params = [{pipeline_mode = #tpu.pipeline_mode<synchronous>, transform_indices = @transform_0, window_bounds = array<i64: 24, 16>}, {pipeline_mode = #tpu.pipeline_mode<synchronous>, transform_indices = @transform_1, window_bounds = array<i64: 16, 32>}, {pipeline_mode = #tpu.pipeline_mode<synchronous>, transform_indices = @transform_2, window_bounds = array<i64: 1, 32>}, {pipeline_mode = #tpu.pipeline_mode<synchronous>, transform_indices = @transform_3, window_bounds = array<i64: 1, 32>}, {pipeline_mode = #tpu.pipeline_mode<synchronous>, transform_indices = @transform_4, window_bounds = array<i64: 1, 32>}, {pipeline_mode = #tpu.pipeline_mode<synchronous>, transform_indices = @transform_5, window_bounds = array<i64: 24, 32>}]} {
    %c0 = arith.constant 0 : index
    %c0_0 = arith.constant 0 : index
    %0 = vector.load %arg1[%c0, %c0_0] : memref<24x16xf32, #tpu.memory_space<vmem>>, vector<24x16xf32>
    %c0_1 = arith.constant 0 : index
    %c0_2 = arith.constant 0 : index
    %1 = vector.load %arg2[%c0_1, %c0_2] : memref<16x32xf32, #tpu.memory_space<vmem>>, vector<16x32xf32>
    %cst = arith.constant dense<0.000000e+00> : vector<24x32xf32>
    %2 = tpu.matmul %0, %1, %cst {dimension_numbers = #tpu.dot_dimension_numbers<[1], [0], [0], [1], [0, 0, 1, 1], [], []>} : vector<24x16xf32>, vector<16x32xf32>, vector<24x32xf32> -> vector<24x32xf32>
    %c0_3 = arith.constant 0 : index
    %c0_4 = arith.constant 0 : index
    %3 = vector.load %arg3[%c0_3, %c0_4] : memref<1x32xf32, #tpu.memory_space<vmem>>, vector<1x32xf32>
    %4 = vector.broadcast %3 : vector<1x32xf32> to vector<24x32xf32>
    %5 = arith.addf %2, %4 : vector<24x32xf32>
    %cst_5 = arith.constant dense<0.000000e+00> : vector<32xf32>
    %6 = vector.multi_reduction <add>, %5, %cst_5 [0] : vector<24x32xf32> to vector<32xf32>
    %7 = vector.shape_cast %6 : vector<32xf32> to vector<1x32xf32>
    %cst_6 = arith.constant 2.400000e+01 : f32
    %8 = vector.broadcast %cst_6 : f32 to vector<1x32xf32>
    %9 = arith.divf %7, %8 : vector<1x32xf32>
    %10 = vector.broadcast %9 : vector<1x32xf32> to vector<24x32xf32>
    %11 = arith.subf %5, %10 : vector<24x32xf32>
    %12 = vector.broadcast %9 : vector<1x32xf32> to vector<24x32xf32>
    %13 = arith.subf %5, %12 : vector<24x32xf32>
    %14 = arith.mulf %11, %13 : vector<24x32xf32>
    %cst_7 = arith.constant dense<0.000000e+00> : vector<32xf32>
    %15 = vector.multi_reduction <add>, %14, %cst_7 [0] : vector<24x32xf32> to vector<32xf32>
    %16 = vector.shape_cast %15 : vector<32xf32> to vector<1x32xf32>
    %cst_8 = arith.constant 2.400000e+01 : f32
    %17 = vector.broadcast %cst_8 : f32 to vector<1x32xf32>
    %18 = arith.divf %16, %17 : vector<1x32xf32>
    %19 = vector.broadcast %9 : vector<1x32xf32> to vector<24x32xf32>
    %20 = arith.subf %5, %19 : vector<24x32xf32>
    %cst_9 = arith.constant 9.99999974E-6 : f32
    %21 = vector.broadcast %cst_9 : f32 to vector<1x32xf32>
    %22 = arith.addf %18, %21 : vector<1x32xf32>
    %23 = math.rsqrt %22 : vector<1x32xf32>
    %24 = vector.broadcast %23 : vector<1x32xf32> to vector<24x32xf32>
    %25 = arith.mulf %20, %24 : vector<24x32xf32>
    %c0_10 = arith.constant 0 : index
    %c0_11 = arith.constant 0 : index
    %26 = vector.load %arg4[%c0_10, %c0_11] : memref<1x32xf32, #tpu.memory_space<vmem>>, vector<1x32xf32>
    %27 = vector.broadcast %26 : vector<1x32xf32> to vector<24x32xf32>
    %28 = arith.mulf %25, %27 : vector<24x32xf32>
    %c0_12 = arith.constant 0 : index
    %c0_13 = arith.constant 0 : index
    %29 = vector.load %arg5[%c0_12, %c0_13] : memref<1x32xf32, #tpu.memory_space<vmem>>, vector<1x32xf32>
    %30 = vector.broadcast %29 : vector<1x32xf32> to vector<24x32xf32>
    %31 = arith.addf %28, %30 : vector<24x32xf32>
    %cst_14 = arith.constant 0.000000e+00 : f32
    %32 = vector.broadcast %cst_14 : f32 to vector<24x32xf32>
    %33 = arith.cmpf ogt, %31, %32 : vector<24x32xf32>
    %cst_15 = arith.constant 0.00999999977 : f32
    %34 = vector.broadcast %cst_15 : f32 to vector<24x32xf32>
    %35 = arith.mulf %34, %31 : vector<24x32xf32>
    %36 = arith.select %33, %31, %35 : vector<24x32xi1>, vector<24x32xf32>
    %c0_16 = arith.constant 0 : index
    %c0_17 = arith.constant 0 : index
    %37 = vector.load %arg6[%c0_16, %c0_17] : memref<24x32xf32, #tpu.memory_space<vmem>>, vector<24x32xf32>
    tpu.vector_store %arg6[%c0_16, %c0_17], %36 {strides = array<i32>} : memref<24x32xf32, #tpu.memory_space<vmem>>, vector<24x32xf32>,
    return
  }
  func.func @transform_0(%arg0: i32) -> (i32, i32) {
    %c0_i32 = arith.constant 0 : i32
    %c0_i32_0 = arith.constant 0 : i32
    %c0_i32_1 = arith.constant 0 : i32
    return %c0_i32, %c0_i32_0 : i32, i32
  }
  func.func @transform_1(%arg0: i32) -> (i32, i32) {
    %c0_i32 = arith.constant 0 : i32
    %c0_i32_0 = arith.constant 0 : i32
    %c0_i32_1 = arith.constant 0 : i32
    return %c0_i32, %c0_i32_0 : i32, i32
  }
  func.func @transform_2(%arg0: i32) -> (i32, i32) {
    %c0_i32 = arith.constant 0 : i32
    %c0_i32_0 = arith.constant 0 : i32
    %c0_i32_1 = arith.constant 0 : i32
    return %c0_i32, %c0_i32_0 : i32, i32
  }
  func.func @transform_3(%arg0: i32) -> (i32, i32) {
    %c0_i32 = arith.constant 0 : i32
    %c0_i32_0 = arith.constant 0 : i32
    %c0_i32_1 = arith.constant 0 : i32
    return %c0_i32, %c0_i32_0 : i32, i32
  }
  func.func @transform_4(%arg0: i32) -> (i32, i32) {
    %c0_i32 = arith.constant 0 : i32
    %c0_i32_0 = arith.constant 0 : i32
    %c0_i32_1 = arith.constant 0 : i32
    return %c0_i32, %c0_i32_0 : i32, i32
  }
  func.func @transform_5(%arg0: i32) -> (i32, i32) {
    %c0_i32 = arith.constant 0 : i32
    %c0_i32_0 = arith.constant 0 : i32
    %c0_i32_1 = arith.constant 0 : i32
    return %c0_i32, %c0_i32_0 : i32, i32
  }
}

</mosaic_0001>

<llo_original>
// kernel: tpu_custom_call.1
$region0: #{tpu_custom_call.1}
  #allocation0 [shape = 'u32[]', space=smem, size = 0x4, offset = 0x4, fixed_abs, tag = 'smem constant byte address 0x4 - core index']
  #allocation1 [shape = 'u32[144,128]{1,0:T(1,128)}', space=vmem, size = 0x12000, scoped, tag = 'internal scratch']
  %s0 = inlined_call_operand.vmem [shape: f32[24,16], index: 0, kind: input, shape index: {}]
  %s1 = inlined_call_operand.vmem [shape: f32[16,32], index: 1, kind: input, shape index: {}]
  %s2 = inlined_call_operand.vmem [shape: f32[1,32], index: 2, kind: input, shape index: {}]
  %s3 = inlined_call_operand.vmem [shape: f32[1,32], index: 3, kind: input, shape index: {}]
  %s4 = inlined_call_operand.vmem [shape: f32[1,32], index: 4, kind: input, shape index: {}]
  %s5 = inlined_call_operand.hbm [shape: f32[24,32], index: 5, kind: output, shape index: {}]
  %s6 = sld [smem:[#allocation0]]
  $region30: #{tpu_custom_call.1} parent=0
    _
  %s8 = ssub.s32 1, %s6
  %s9 = scalar_select 0, %s8, %s6
  $region1: #{tpu_custom_call.1} parent=0
    #allocation2 [shape = 'u8[12288]{0}', space=vmem, size = 0x3000, scoped, tag = 'output window, operand 0, single buffered']
    #allocation3 [shape = 's32[1]{0}', space=sflag, size = 0x4, scoped, tag = 'scoped memory for tpu_custom_call.1']
    %10 = vsyncpa [#allocation3], 0
    // Predicated region
    $region2: #{tpu_custom_call.1} parent=1 // pred_check
      _
    $region3: #{tpu_custom_call.1} parent=1 // pred_check_branch
      %12 = sbr.rel (0) target = $region5
    $region4: #{tpu_custom_call.1} parent=1 // pred_region
      _
    $region5: #{tpu_custom_call.1} parent=1 // pred_fallthru
      _
    // Predicated region
    $region6: #{tpu_custom_call.1} parent=1 // pred_check
      _
    $region7: #{tpu_custom_call.1} parent=1 // pred_check_branch
      %14 = sbr.rel (0) target = $region9
    $region8: #{tpu_custom_call.1} parent=1 // pred_region
      _
    $region9: #{tpu_custom_call.1} parent=1 // pred_fallthru
      _
    // Predicated region
    $region10: #{tpu_custom_call.1} parent=1 // pred_check
      _
    $region11: #{tpu_custom_call.1} parent=1 // pred_check_branch
      %16 = sbr.rel (0) target = $region13
    $region12: #{tpu_custom_call.1} parent=1 // pred_region
      _
    $region13: #{tpu_custom_call.1} parent=1 // pred_fallthru
      _
    // Predicated region
    $region14: #{tpu_custom_call.1} parent=1 // pred_check
      _
    $region15: #{tpu_custom_call.1} parent=1 // pred_check_branch
      %18 = sbr.rel (0) target = $region17
    $region16: #{tpu_custom_call.1} parent=1 // pred_region
      _
    $region17: #{tpu_custom_call.1} parent=1 // pred_fallthru
      _
    // Predicated region
    $region18: #{tpu_custom_call.1} parent=1 // pred_check
      _
    $region19: #{tpu_custom_call.1} parent=1 // pred_check_branch
      %20 = sbr.rel (0) target = $region21
    $region20: #{tpu_custom_call.1} parent=1 // pred_region
      _
    $region21: #{tpu_custom_call.1} parent=1 // pred_fallthru
      _
    %v21 = vld [vmem:[%s0] sm:$0xff]
    %v22 = vld [vmem:[%s0 + $0x8] sm:$0xff]
    %v23 = vld [vmem:[%s0 + $0x10] sm:$0xff]
    %v24 = vld [vmem:[%s1] sm:$0xff]
    %v25 = vld [vmem:[%s1 + $0x8] sm:$0xff]
    %v26 = vld [vmem:[%s2] sm:$0x1]
    %v28 = vlaneseq
    %v29 = vshrl.u32 %v28, 7
    %v30 = vsub.s32 0, %v29
    %v31 = vrot.slane %v26, %v30
    %vm33 = vcmask 130048
    %v35 = vsel %vm33, %v21, 0
    %v38 = vsel %vm33, %v22, 0
    %v41 = vsel %vm33, %v23, 0
    %43 = vmatprep.subr.mxu0 0.0
    %44 = vmatpush1.msra.mxu0 %v24
    %45 = vmatprep.subr.mxu0 0.0
    %46 = vmatpush1.msra.mxu0 %v25
    %47 = vmatprep.subr.mxu0 0.0
    %48 = vmatpush1.msra.mxu0 0.0
    %49 = vmatprep.subr.mxu0 0.0
    %50 = vmatpush1.msra.mxu0 0.0
    %51 = vmatprep.subr.mxu0 0.0
    %52 = vmatpush1.msra.mxu0 0.0
    %53 = vmatprep.subr.mxu0 0.0
    %54 = vmatpush1.msra.mxu0 0.0
    %55 = vmatprep.subr.mxu0 0.0
    %56 = vmatpush1.msra.mxu0 0.0
    %57 = vmatprep.subr.mxu0 0.0
    %58 = vmatpush1.msra.mxu0 0.0
    %59 = vmatprep.subr.mxu0 0.0
    %60 = vmatpush1.msra.mxu0 0.0
    %61 = vmatprep.subr.mxu0 0.0
    %62 = vmatpush1.msra.mxu0 0.0
    %63 = vmatprep.subr.mxu0 0.0
    %64 = vmatpush1.msra.mxu0 0.0
    %65 = vmatprep.subr.mxu0 0.0
    %66 = vmatpush1.msra.mxu0 0.0
    %67 = vmatprep.subr.mxu0 0.0
    %68 = vmatpush1.msra.mxu0 0.0
    %69 = vmatprep.subr.mxu0 0.0
    %70 = vmatpush1.msra.mxu0 0.0
    %71 = vmatprep.subr.mxu0 0.0
    %72 = vmatpush1.msra.mxu0 0.0
    %73 = vmatprep.subr.mxu0 0.0
    %74 = vmatpush1.msra.mxu0 0.0
    %75 = vmatprep.subr.mxu0 0.0
    %76 = vmatpush1.msra.mxu0 0.0
    %77 = vmatprep.subr.mxu0 0.0
    %78 = vmatpush1.msra.mxu0 0.0
    %79 = vmatprep.subr.mxu0 0.0
    %80 = vmatpush1.msra.mxu0 0.0
    %81 = vmatprep.subr.mxu0 0.0
    %82 = vmatpush1.msra.mxu0 0.0
    %83 = vmatprep.subr.mxu0 0.0
    %84 = vmatpush1.msra.mxu0 0.0
    %85 = vmatprep.subr.mxu0 0.0
    %86 = vmatpush1.msra.mxu0 0.0
    %87 = vmatprep.subr.mxu0 0.0
    %88 = vmatpush1.msra.mxu0 0.0
    %89 = vmatprep.subr.mxu0 0.0
    %90 = vmatpush1.msra.mxu0 0.0
    %91 = vmatprep.subr.mxu0 0.0
    %92 = vmatpush1.msra.mxu0 0.0
    %93 = vmatprep.subr.mxu0 0.0
    %94 = vmatpush1.msra.mxu0 0.0
    %95 = vmatprep.subr.mxu0 0.0
    %96 = vmatpush1.msra.mxu0 0.0
    %97 = vmatprep.subr.mxu0 0.0
    %98 = vmatpush1.msra.mxu0 0.0
    %99 = vmatprep.subr.mxu0 0.0
    %100 = vmatpush1.msra.mxu0 0.0
    %101 = vmatprep.subr.mxu0 0.0
    %102 = vmatpush1.msra.mxu0 0.0
    %103 = vmatprep.subr.mxu0 0.0
    %104 = vmatpush1.msra.mxu0 0.0
    %105 = vmatprep.subr.mxu0 0.0
    %106 = vmatpush1.msra.mxu0 0.0
    %107 = vmatprep.mubr.f32.mxu0 0.0
    %108 = vmatmul.mubr.f32.gmra.mrb[0].mxu0 %v35
    %v109 = vpop.f32.mrb[0].mxu0
    %v110 = vadd.f32 %v31, %v109
    %v111 = vpop.f32.mrb[0].mxu0
    %112 = vmatprep.mubr.f32.mxu0 0.0
    %113 = vmatmul.mubr.f32.gmra.mrb[0].mxu0 %v38
    %v114 = vpop.f32.mrb[0].mxu0
    %v115 = vadd.f32 %v31, %v114
    %v116 = vpop.f32.mrb[0].mxu0
    %117 = vmatprep.mubr.f32.mxu0 0.0
    %118 = vmatmul.mubr.f32.gmra.mrb[0].mxu0 %v41
    %v119 = vpop.f32.mrb[0].mxu0
    %v120 = vadd.f32 %v31, %v119
    %v121 = vpop.f32.mrb[0].mxu0
    %122 = vdwg.mxu0
    %vm123 = vcmask 261120
    %v124 = vsel %vm123, %v110, 0.0
    %v125 = vsel %vm123, %v115, 0.0
    %v126 = vadd.f32 %v124, %v125
    %v127 = vsel %vm123, %v120, 0.0
    %v128 = vadd.f32 %v126, %v127
    %v129 = vrot.slane %v128, 4
    %v130 = vadd.f32 %v128, %v129
    %v131 = vrot.slane %v130, 2
    %v132 = vadd.f32 %v130, %v131
    %v133 = vrot.slane %v132, 1
    %v134 = vadd.f32 %v132, %v133
    %v135 = vrcp.pop 24.0
    %v136 = vmul.f32 %v134, %v135
    %v137 = vsub.f32 %v110, %v136
    %v138 = vsub.f32 %v115, %v136
    %v139 = vsub.f32 %v120, %v136
    %v140 = vmul.f32 %v137, %v137
    %v141 = vmul.f32 %v138, %v138
    %v142 = vmul.f32 %v139, %v139
    %v143 = vsel %vm123, %v140, 0.0
    %v144 = vsel %vm123, %v141, 0.0
    %v145 = vadd.f32 %v143, %v144
    %v146 = vsel %vm123, %v142, 0.0
    %v147 = vadd.f32 %v145, %v146
    %v148 = vrot.slane %v147, 4
    %v149 = vadd.f32 %v147, %v148
    %v150 = vrot.slane %v149, 2
    %v151 = vadd.f32 %v149, %v150
    %v152 = vrot.slane %v151, 1
    %v153 = vadd.f32 %v151, %v152
    %v154 = vmul.f32 %v153, %v135
    %v155 = vadd.f32 %v154, 1e-05
    %v156 = vrsqrt.pop %v155
    %v157 = vmul.f32 %v137, %v156
    %v158 = vmul.f32 %v138, %v156
    %v159 = vmul.f32 %v139, %v156
    %v160 = vld [vmem:[%s3] sm:$0x1]
    %v162 = vlaneseq
    %v163 = vshrl.u32 %v162, 7
    %v164 = vsub.s32 0, %v163
    %v165 = vrot.slane %v160, %v164
    %v167 = vmul.f32 %v157, %v165
    %v168 = vmul.f32 %v158, %v165
    %v169 = vmul.f32 %v159, %v165
    %v170 = vld [vmem:[%s4] sm:$0x1]
    %v172 = vlaneseq
    %v173 = vshrl.u32 %v172, 7
    %v174 = vsub.s32 0, %v173
    %v175 = vrot.slane %v170, %v174
    %v177 = vadd.f32 %v167, %v175
    %v178 = vadd.f32 %v168, %v175
    %v179 = vadd.f32 %v169, %v175
    %vm180 = vcmp.gt.f32.partialorder %v177, 0.0
    %vm181 = vcmp.gt.f32.partialorder %v178, 0.0
    %vm182 = vcmp.gt.f32.partialorder %v179, 0.0
    %v183 = vmul.f32 %v177, 0.01
    %v184 = vmul.f32 %v178, 0.01
    %v185 = vmul.f32 %v179, 0.01
    %v186 = vsel %vm180, %v177, %v183
    %v187 = vsel %vm181, %v178, %v184
    %v188 = vsel %vm182, %v179, %v185
    %189 = vst.msk [vmem:[#allocation2] sm:$0xff] %vm123, %v186
    %190 = vst.msk [vmem:[#allocation2 + $0x8] sm:$0xff] %vm123, %v187
    %191 = vst.msk [vmem:[#allocation2 + $0x10] sm:$0xff] %vm123, %v188
    // Predicated region
    $region22: #{tpu_custom_call.1} parent=1 // pred_check
      _
    $region23: #{tpu_custom_call.1} parent=1 // pred_check_branch
      %193 = sbr.rel (0) target = $region25
    $region24: #{tpu_custom_call.1} parent=1 // pred_region
      %s195 = ssub.s32 384, 384
      %196 = vsyncadd [#allocation3], %s195
      %s197 = sshll.u32 [#allocation2], 4
      %s198 = int_to_ptr.vmem [resolvable:$true] %s197
      %203 = dma.vmem_to_hbm [thread:$0]  %s198, 384, %s5, [#allocation3], 128, 128, 8
    $region25: #{tpu_custom_call.1} parent=1 // pred_fallthru
      _
    // Predicated region
    $region26: #{tpu_custom_call.1} parent=1 // pred_check
      _
    $region27: #{tpu_custom_call.1} parent=1 // pred_check_branch
      %205 = sbr.rel (0) target = $region29
    $region28: #{tpu_custom_call.1} parent=1 // pred_region
      %206 = dma.done [#allocation3], 384
    $region29: #{tpu_custom_call.1} parent=1 // pred_fallthru
      _
    %207 = vsyncpa [#allocation3], 1

</llo_original>
